<compile_context>
chip_gen: v6e
topology: v6e:2x2x1
jax: 0.10.0
libtpu: 0.0.40
codegen_flags: <defaults>
</compile_context>

<pallas_src>
import functools
import numpy as np
import jax
import jax.numpy as jnp
from jax import lax
from jax.experimental import pallas as pl
from jax.experimental.pallas import tpu as pltpu


def _round_up(x, m):
    return ((x + m - 1) // m) * m


# ----------------------------- in-kernel helpers -----------------------------

def _layernorm(x, g, b, lane_mask, inv_c, eps=1e-5):
    """Exact LayerNorm over the valid C lanes of a Cp-padded slab.

    Relies on pad lanes of `x` being exactly zero (maintained by zero-padded
    weights); g/b are zero-padded so pad lanes of the output stay zero."""
    mu = jnp.sum(x, axis=-1, keepdims=True) * inv_c
    d = (x - mu) * lane_mask
    var = jnp.sum(d * d, axis=-1, keepdims=True) * inv_c
    return d * lax.rsqrt(var + eps) * g + b


def _layer_compute(x, wts, attn_sc, lane_mask, key_mask, *, bt, Tp, H, Dhp, inv_c):
    """One pre-norm transformer block on the f32 residual slab x: [M, Cp]."""
    (l1g, l1b, wq, wk, wv, wo, bo, l2g, l2b, w1, b1, w2, b2) = wts
    M, Cp = x.shape
    HDp = H * Dhp

    # --- multi-head self-attention (scale pre-folded into wq) ---
    xn = _layernorm(x, l1g, l1b, lane_mask, inv_c).astype(jnp.bfloat16)
    q = jnp.dot(xn, wq, preferred_element_type=jnp.float32).astype(jnp.bfloat16)
    k = jnp.dot(xn, wk, preferred_element_type=jnp.float32).astype(jnp.bfloat16)
    v = jnp.dot(xn, wv, preferred_element_type=jnp.float32).astype(jnp.bfloat16)
    q3 = q.reshape(bt, Tp, HDp)          # leading-dim split only (Tp % 8 == 0)
    k3 = k.reshape(bt, Tp, HDp)
    v3 = v.reshape(bt, Tp, HDp)

    for h in range(H):                   # static; head slices are 128-lane aligned
        sl = slice(h * Dhp, (h + 1) * Dhp)
        s = jnp.einsum('bqd,bkd->bqk', q3[:, :, sl], k3[:, :, sl],
                       preferred_element_type=jnp.float32)          # [bt, Tp, Tp]
        s = s + key_mask
        s = s - jnp.max(s, axis=-1, keepdims=True)
        p = jnp.exp(s)
        p = p * pl.reciprocal(jnp.sum(p, axis=-1, keepdims=True), approx=True)
        pv = jnp.einsum('bqk,bkd->bqd', p.astype(jnp.bfloat16), v3[:, :, sl],
                        preferred_element_type=jnp.float32)          # [bt, Tp, Dhp]
        # write each head's result straight into the VMEM slab (bounds live ranges)
        attn_sc[:, sl] = pv.reshape(M, Dhp).astype(jnp.bfloat16)

    attn = jnp.dot(attn_sc[...], wo, preferred_element_type=jnp.float32) + bo
    x = x + attn

    # --- MLP ---
    xn2 = _layernorm(x, l2g, l2b, lane_mask, inv_c).astype(jnp.bfloat16)
    h1 = jnp.dot(xn2, w1, preferred_element_type=jnp.float32) + b1
    # TODO(synk): timm Block uses exact (erf) GELU; tanh approximation kept since erf
    # lowering availability in Mosaic varies across versions.
    h1 = jax.nn.gelu(h1, approximate=True)
    h2 = jnp.dot(h1.astype(jnp.bfloat16), w2, preferred_element_type=jnp.float32) + b2
    return x + h2


def _masks(Cp, Tp, c_valid, t_valid):
    lane_mask = (lax.broadcasted_iota(jnp.int32, (1, Cp), 1) < c_valid
                 ).astype(jnp.float32)
    key_mask = jnp.where(lax.broadcasted_iota(jnp.int32, (1, 1, Tp), 2) < t_valid,
                         0.0, -1e30).astype(jnp.float32)
    return lane_mask, key_mask


# ----------------------------- Pallas kernels -----------------------------

def _patch_embed_kernel(x_ref, w_ref, b_ref, pos_ref, o_ref):
    # x_ref: [bt, n, P]  w_ref: [P, Cp] bf16  b_ref: [1, Cp]  pos_ref: [n, Cp]
    # o_ref: [bt, n, Cp] bf16
    y = jnp.einsum('bnp,pc->bnc', x_ref[...].astype(jnp.bfloat16), w_ref[...],
                   preferred_element_type=jnp.float32)
    o_ref[...] = (y + pos_ref[...] + b_ref[...]).astype(o_ref.dtype)


def _encoder_streamed_kernel(x_ref, l1g, l1b, wq, wk, wv, wo, bo, l2g, l2b,
                             w1, b1, w2, b2, lng, lnb, o_ref, h_ref, attn_sc,
                             *, num_heads, dhp, c_valid, t_valid):
    """grid = (batch_tiles["parallel"], num_layer["arbitrary"]); weights streamed."""
    l = pl.program_id(1)
    bt, Tp, Cp = x_ref.shape
    M = bt * Tp
    lane_mask, key_mask = _masks(Cp, Tp, c_valid, t_valid)
    inv_c = 1.0 / c_valid

    @pl.when(l == 0)
    def _():
        h_ref[...] = x_ref[...].reshape(M, Cp).astype(jnp.float32)

    wts = (l1g[0], l1b[0], wq[0], wk[0], wv[0], wo[0], bo[0],
           l2g[0], l2b[0], w1[0], b1[0], w2[0], b2[0])
    x = _layer_compute(h_ref[...], wts, attn_sc, lane_mask, key_mask,
                       bt=bt, Tp=Tp, H=num_heads, Dhp=dhp, inv_c=inv_c)
    h_ref[...] = x

    @pl.when(l == pl.num_programs(1) - 1)
    def _():
        o_ref[...] = _layernorm(x, lng[...], lnb[...], lane_mask, inv_c
                                ).reshape(bt, Tp, Cp).astype(o_ref.dtype)


def _encoder_resident_kernel(x_ref, l1g, l1b, wq, wk, wv, wo, bo, l2g, l2b,
                             w1, b1, w2, b2, lng, lnb, o_ref, h_ref, attn_sc,
                             *, num_layer, num_heads, dhp, c_valid, t_valid):
    """Small-config path: full [L, ...] weights VMEM-resident, layer loop in-kernel."""
    bt, Tp, Cp = x_ref.shape
    M = bt * Tp
    lane_mask, key_mask = _masks(Cp, Tp, c_valid, t_valid)
    inv_c = 1.0 / c_valid

    h_ref[...] = x_ref[...].reshape(M, Cp).astype(jnp.float32)

    def body(l, carry):
        wts = (l1g[l], l1b[l], wq[l], wk[l], wv[l], wo[l], bo[l],
               l2g[l], l2b[l], w1[l], b1[l], w2[l], b2[l])
        h_ref[...] = _layer_compute(h_ref[...], wts, attn_sc, lane_mask, key_mask,
                                    bt=bt, Tp=Tp, H=num_heads, Dhp=dhp, inv_c=inv_c)
        return carry

    lax.fori_loop(0, num_layer, body, 0)

    o_ref[...] = _layernorm(h_ref[...], lng[...], lnb[...], lane_mask, inv_c
                            ).reshape(bt, Tp, Cp).astype(o_ref.dtype)


# ----------------------------- pallas_call wrappers -----------------------------

def _pick_batch_tile(B, rows_per_example, target_rows=512):
    cap = max(1, target_rows // max(rows_per_example, 1))
    bt = 1
    for d in range(1, B + 1):
        if B % d == 0 and d <= cap:
            bt = d
    return bt


def _num_tensorcores():
    # 2 TensorCores per device on v7x; single-TC on v5e/v6e (b_tiles=2 there would
    # just duplicate weight streaming and grid-step overhead).
    try:
        kind = jax.devices()[0].device_kind.lower()
    except Exception:
        return 1
    return 2 if ('v7' in kind or '7x' in kind) else 1


def patch_embed(x3, w, b, pos, *, bt):
    # x3: [B, n, P] f32   w: [P, Cp] bf16   b: [1, Cp]   pos: [n, Cp]  -> [B, n, Cp] bf16
    B, n, P = x3.shape
    Cp = w.shape[1]
    return pl.pallas_call(
        _patch_embed_kernel,
        out_shape=jax.ShapeDtypeStruct((B, n, Cp), jnp.bfloat16),
        grid=(B // bt,),
        in_specs=[pl.BlockSpec((bt, n, P), lambda i: (i, 0, 0)),
                  pl.BlockSpec((P, Cp), lambda i: (0, 0)),
                  pl.BlockSpec((1, Cp), lambda i: (0, 0)),
                  pl.BlockSpec((n, Cp), lambda i: (0, 0))],
        out_specs=pl.BlockSpec((bt, n, Cp), lambda i: (i, 0, 0)),
        compiler_params=pltpu.CompilerParams(dimension_semantics=("parallel",)),
    )(x3, w, b, pos)


_LAYER_NAMES = ('ln1_g', 'ln1_b', 'wq', 'wk', 'wv', 'wproj', 'bproj',
                'ln2_g', 'ln2_b', 'w1', 'b1', 'w2', 'b2')


def _stack_layers(layers, *, emb_dim, num_heads, cp, dhp, hp):
    """Stack per-layer params to [L, ...], zero-padded to lane-dense shapes.

    q/k/v columns are re-laid out head-major with each head padded to dhp lanes so
    in-kernel head slices are 128-aligned; the attention scale is folded into wq."""
    C, H = emb_dim, num_heads
    Dh = C // H
    scale = Dh ** -0.5

    def pad2(w, r, c):
        return jnp.pad(w, ((0, r - w.shape[0]), (0, c - w.shape[1])))

    def head_cols(w):                       # [C, C] -> [Cp, H*Dhp]
        w4 = jnp.pad(w.reshape(C, H, Dh), ((0, cp - C), (0, 0), (0, dhp - Dh)))
        return w4.reshape(cp, H * dhp)

    def head_rows(w):                       # [C, C] -> [H*Dhp, Cp]
        w4 = jnp.pad(w.reshape(H, Dh, C), ((0, 0), (0, dhp - Dh), (0, cp - C)))
        return w4.reshape(H * dhp, cp)

    st = {
        'ln1_g': jnp.stack([pad2(lp['ln1_g'], 1, cp) for lp in layers]),
        'ln1_b': jnp.stack([pad2(lp['ln1_b'], 1, cp) for lp in layers]),
        'wq': jnp.stack([head_cols(lp['wq'] * scale) for lp in layers]).astype(jnp.bfloat16),
        'wk': jnp.stack([head_cols(lp['wk']) for lp in layers]).astype(jnp.bfloat16),
        'wv': jnp.stack([head_cols(lp['wv']) for lp in layers]).astype(jnp.bfloat16),
        'wproj': jnp.stack([head_rows(lp['wproj']) for lp in layers]).astype(jnp.bfloat16),
        'bproj': jnp.stack([pad2(lp['bproj'], 1, cp) for lp in layers]),
        'ln2_g': jnp.stack([pad2(lp['ln2_g'], 1, cp) for lp in layers]),
        'ln2_b': jnp.stack([pad2(lp['ln2_b'], 1, cp) for lp in layers]),
        'w1': jnp.stack([pad2(lp['w1'], cp, hp) for lp in layers]).astype(jnp.bfloat16),
        'b1': jnp.stack([pad2(lp['b1'], 1, hp) for lp in layers]),
        'w2': jnp.stack([pad2(lp['w2'], hp, cp) for lp in layers]).astype(jnp.bfloat16),
        'b2': jnp.stack([pad2(lp['b2'], 1, cp) for lp in layers]),
    }
    return st


def _vmem_budget_bytes(bt, Tp, Cp, hdp, hp, per_layer_w_bytes, total_w_bytes, resident):
    M = bt * Tp
    act = (2 * 2 * bt * Tp * Cp * 2      # bf16 in + out blocks, double-buffered
           + M * Cp * 4                  # f32 residual scratch
           + M * hdp * 2                 # bf16 attention slab scratch
           + M * hp * 4                  # transient MLP hidden (f32)
           + 3 * M * hdp * 2)            # transient q/k/v (bf16)
    wts = total_w_bytes if resident else 2 * per_layer_w_bytes
    est = act + wts
    # TODO(synk): for very large configs split w1/w2 along the hidden dim into an extra
    # streamed grid axis instead of raising this cap (v7x has only 64 MiB VMEM).
    return int(min(max(2 * est, 32 * 1024 * 1024), 56 * 1024 * 1024))


def mae_transformer(xbt, stacked, final_g, final_b, *, num_heads, dhp, t_valid,
                    c_valid, b_tiles, weights_resident, vmem_limit_bytes):
    B, Tp, Cp = xbt.shape
    L = stacked['wq'].shape[0]
    bt = B // b_tiles
    M = bt * Tp
    hdp = num_heads * dhp
    warrs = [stacked[n] for n in _LAYER_NAMES]

    scratch = [pltpu.VMEM((M, Cp), jnp.float32),        # f32 residual stream
               pltpu.VMEM((M, hdp), jnp.bfloat16)]      # attention head slab
    out_shape = jax.ShapeDtypeStruct((B, Tp, Cp), jnp.bfloat16)

    if weights_resident:
        kern = functools.partial(_encoder_resident_kernel, num_layer=L,
                                 num_heads=num_heads, dhp=dhp,
                                 c_valid=c_valid, t_valid=t_valid)

        def wspec(arr):
            nd = arr.ndim
            return pl.BlockSpec(arr.shape, lambda b, _nd=nd: (0,) * _nd)

        in_specs = ([pl.BlockSpec((bt, Tp, Cp), lambda b: (b, 0, 0))]
                    + [wspec(a) for a in warrs]
                    + [pl.BlockSpec(final_g.shape, lambda b: (0, 0)),
                       pl.BlockSpec(final_b.shape, lambda b: (0, 0))])
        out_specs = pl.BlockSpec((bt, Tp, Cp), lambda b: (b, 0, 0))
        grid = (b_tiles,)
        dims = ("parallel",)
    else:
        kern = functools.partial(_encoder_streamed_kernel, num_heads=num_heads,
                                 dhp=dhp, c_valid=c_valid, t_valid=t_valid)

        def wspec(arr):
            s, nd = arr.shape, arr.ndim
            return pl.BlockSpec((1,) + s[1:],
                                lambda b, l, _nd=nd: (l,) + (0,) * (_nd - 1))

        in_specs = ([pl.BlockSpec((bt, Tp, Cp), lambda b, l: (b, 0, 0))]
                    + [wspec(a) for a in warrs]
                    + [pl.BlockSpec(final_g.shape, lambda b, l: (0, 0)),
                       pl.BlockSpec(final_b.shape, lambda b, l: (0, 0))])
        out_specs = pl.BlockSpec((bt, Tp, Cp), lambda b, l: (b, 0, 0))
        grid = (b_tiles, L)
        dims = ("parallel", "arbitrary")

    return pl.pallas_call(
        kern,
        out_shape=out_shape,
        grid=grid,
        in_specs=in_specs,
        out_specs=out_specs,
        scratch_shapes=scratch,
        compiler_params=pltpu.CompilerParams(
            dimension_semantics=dims, vmem_limit_bytes=vmem_limit_bytes),
    )(xbt, *warrs, final_g, final_b)


# ----------------------------- parameters -----------------------------

def init_params(key, *, input_size, patch_size, emb_dim, num_layer):
    n_tokens = input_size // patch_size
    keys = jax.random.split(key, 4 + num_layer)
    std = 0.02
    params = {
        'cls_token': std * jax.random.normal(keys[0], (1, 1, emb_dim), jnp.float32),
        'pos_embedding': std * jax.random.normal(keys[1], (n_tokens, 1, emb_dim), jnp.float32),
        # Conv2d(1, emb, (1, ps), (1, ps)) weight [emb, 1, 1, ps] stored as [ps, emb]
        'patch_w': std * jax.random.normal(keys[2], (patch_size, emb_dim), jnp.float32),
        'patch_b': std * jax.random.normal(keys[3], (1, emb_dim), jnp.float32),
        'ln_g': jnp.ones((1, emb_dim), jnp.float32),
        'ln_b': jnp.zeros((1, emb_dim), jnp.float32),
        'layers': [],
    }
    for l in range(num_layer):
        lk = jax.random.split(keys[4 + l], 5)
        params['layers'].append({
            'ln1_g': jnp.ones((1, emb_dim), jnp.float32),
            'ln1_b': jnp.zeros((1, emb_dim), jnp.float32),
            # qkv weights kept pre-split (qkv_bias=False, timm default)
            'wq': std * jax.random.normal(lk[0], (emb_dim, emb_dim), jnp.float32),
            'wk': std * jax.random.normal(lk[1], (emb_dim, emb_dim), jnp.float32),
            'wv': std * jax.random.normal(lk[2], (emb_dim, emb_dim), jnp.float32),
            'wproj': std * jax.random.normal(lk[3], (emb_dim, emb_dim), jnp.float32),
            'bproj': jnp.zeros((1, emb_dim), jnp.float32),
            'ln2_g': jnp.ones((1, emb_dim), jnp.float32),
            'ln2_b': jnp.zeros((1, emb_dim), jnp.float32),
            'w1': std * jax.random.normal(lk[4], (emb_dim, 4 * emb_dim), jnp.float32),
            'b1': jnp.zeros((1, 4 * emb_dim), jnp.float32),
            'w2': std * jax.random.normal(jax.random.fold_in(lk[4], 1),
                                          (4 * emb_dim, emb_dim), jnp.float32),
            'b2': jnp.zeros((1, emb_dim), jnp.float32),
        })
    return params


# ----------------------------- forward pass -----------------------------

def mae_encoder_forward(x, params, *, patch_size, num_heads, mask_ratio, shuffle_seed=0):
    B, Cin, Himg, L_in = x.shape
    assert Cin == 1
    n_w = L_in // patch_size
    n = Himg * n_w                       # number of patch tokens, order = (h w)
    C = params['patch_w'].shape[1]
    nh = num_heads
    Dh = C // nh
    Cp = _round_up(C, 128)
    Dhp = _round_up(Dh, 128)
    Hp = _round_up(4 * C, 128)

    # --- patch embedding: Conv2d(1, C, (1, ps), (1, ps)) == per-patch matmul (+ pos) ---
    x3 = x.reshape(B, Himg, n_w, patch_size).reshape(B, n, patch_size).astype(jnp.float32)
    patch_w = jnp.pad(params['patch_w'], ((0, 0), (0, Cp - C))).astype(jnp.bfloat16)
    patch_b = jnp.pad(params['patch_b'], ((0, 0), (0, Cp - C)))
    pos = jnp.pad(params['pos_embedding'][:, 0, :], ((0, 0), (0, Cp - C)))
    bt_pe = _pick_batch_tile(B, n)
    emb3 = patch_embed(x3, patch_w, patch_b, pos, bt=bt_pe)          # [B, n, Cp] bf16

    # --- PatchShuffle: per-batch random permutation, keep first remain_t tokens ---
    # TODO(synk): index generation is host-side numpy (as in the PyTorch module); the
    # gather/cls-concat/pad glue stays in XLA (a PrefetchScalarGridSpec + pl.Element
    # row-gather would let the transformer kernel DMA the gathered sequence directly).
    rng = np.random.default_rng(shuffle_seed)
    fwd = np.stack([rng.permutation(n) for _ in range(B)], axis=-1)   # [n, B]
    bwd = np.argsort(fwd, axis=0)                                     # [n, B]
    remain_t = int(n * (1 - mask_ratio))
    keep_idx = jnp.asarray(fwd[:remain_t].T, dtype=jnp.int32)         # [B, rt]
    kept = jnp.take_along_axis(
        emb3, jnp.broadcast_to(keep_idx[:, :, None], (B, remain_t, Cp)), axis=1)

    cls = jnp.pad(params['cls_token'][0], ((0, 0), (0, Cp - C)))      # [1, Cp]
    cls_b = jnp.broadcast_to(cls[None].astype(jnp.bfloat16), (B, 1, Cp))
    seq = jnp.concatenate([cls_b, kept], axis=1)                      # [B, T, Cp] bf16
    T = 1 + remain_t

    # pad T: multiple of 8 sublanes for tiny T, toward 128 lanes when T is large
    # (padded key positions are masked with -1e30 inside attention)
    Tp = _round_up(T, 128) if T >= 96 else _round_up(T, 8)
    xbt = jnp.pad(seq, ((0, 0), (0, Tp - T), (0, 0)))                 # [B, Tp, Cp]

    # --- fused transformer stack + final LayerNorm in a single pallas_call ---
    stacked = _stack_layers(params['layers'], emb_dim=C, num_heads=nh,
                            cp=Cp, dhp=Dhp, hp=Hp)
    final_g = jnp.pad(params['ln_g'], ((0, 0), (0, Cp - C)))
    final_b = jnp.pad(params['ln_b'], ((0, 0), (0, Cp - C)))

    total_w_bytes = sum(int(stacked[k].size) * stacked[k].dtype.itemsize
                        for k in _LAYER_NAMES)
    per_layer_w_bytes = total_w_bytes // len(params['layers'])
    weights_resident = total_w_bytes <= 4 * 1024 * 1024

    b_tiles = 1
    if _num_tensorcores() >= 2 and B % 2 == 0 and (B // 2) * Tp >= 256:
        b_tiles = 2                      # shard batch across the 2 TensorCores (v7x)

    vmem_limit = _vmem_budget_bytes(B // b_tiles, Tp, Cp, nh * Dhp, Hp,
                                    per_layer_w_bytes, total_w_bytes, weights_resident)

    out = mae_transformer(xbt, stacked, final_g, final_b,
                          num_heads=nh, dhp=Dhp, t_valid=T, c_valid=C,
                          b_tiles=b_tiles, weights_resident=weights_resident,
                          vmem_limit_bytes=vmem_limit)                # [B, Tp, Cp] bf16

    features = out[:, :T, :C].astype(jnp.float32).transpose(1, 0, 2)  # [T, B, C]
    restore_indexes = jnp.asarray(bwd, dtype=jnp.int32)               # [t, B]
    return features, restore_indexes


# ----------------------------- demo -----------------------------

if __name__ == "__main__":
    B = 2
    input_size = 64
    patch_size = 8
    emb_dim = 32
    num_layer = 2
    num_head = 4
    mask_ratio = 0.75

    key = jax.random.PRNGKey(0)
    pkey, xkey = jax.random.split(key)
    params = init_params(pkey, input_size=input_size, patch_size=patch_size,
                         emb_dim=emb_dim, num_layer=num_layer)
    # NCHW input, H=1, W=input_size (1-D signal through Conv2d(1, emb, (1, ps)))
    x = jax.random.normal(xkey, (B, 1, 1, input_size), jnp.float32)

    features, restore_indexes = mae_encoder_forward(
        x, params, patch_size=patch_size, num_heads=num_head,
        mask_ratio=mask_ratio, shuffle_seed=0)
    jax.block_until_ready(features)

    n_tokens = input_size // patch_size
    expected_T = int(n_tokens * (1 - mask_ratio)) + 1
    assert features.shape == (expected_T, B, emb_dim), features.shape
    assert restore_indexes.shape == (n_tokens, B), restore_indexes.shape
    assert bool(jnp.all(jnp.isfinite(features)))
    print("KERNEL_OK")
</pallas_src>

<mosaic_0001>
module attributes {stable_mosaic.version = 11 : i64} {
  func.func @_patch_embed_kernel(%arg0: i32, %arg1: memref<2x8x8xf32, #tpu.memory_space<vmem>>, %arg2: memref<8x128xbf16, #tpu.memory_space<vmem>>, %arg3: memref<1x128xf32, #tpu.memory_space<vmem>>, %arg4: memref<8x128xf32, #tpu.memory_space<vmem>>, %arg5: memref<2x8x128xbf16, #tpu.memory_space<vmem>>) attributes {dimension_semantics = [#tpu.dimension_semantics<parallel>], iteration_bounds = array<i64: 1>, scalar_prefetch = 0 : i64, scratch_operands = 0 : i64, tpu.core_type = #tpu.core_type<tc>, window_params = [{transform_indices = @transform_0, window_bounds = array<i64: 2, 8, 8>}, {pipeline_mode = #tpu.pipeline_mode<synchronous>, transform_indices = @transform_1, window_bounds = array<i64: 8, 128>}, {pipeline_mode = #tpu.pipeline_mode<synchronous>, transform_indices = @transform_2, window_bounds = array<i64: 1, 128>}, {pipeline_mode = #tpu.pipeline_mode<synchronous>, transform_indices = @transform_3, window_bounds = array<i64: 8, 128>}, {transform_indices = @transform_4, window_bounds = array<i64: 2, 8, 128>}]} {
    %c0 = arith.constant 0 : index
    %c0_0 = arith.constant 0 : index
    %c0_1 = arith.constant 0 : index
    %0 = vector.load %arg1[%c0, %c0_0, %c0_1] : memref<2x8x8xf32, #tpu.memory_space<vmem>>, vector<2x8x8xf32>
    %1 = arith.truncf %0 : vector<2x8x8xf32> to vector<2x8x8xbf16>
    %c0_2 = arith.constant 0 : index
    %c0_3 = arith.constant 0 : index
    %2 = vector.load %arg2[%c0_2, %c0_3] : memref<8x128xbf16, #tpu.memory_space<vmem>>, vector<8x128xbf16>
    "tpu.trace_start"() <{level = 10 : i32, message = "bnp,pc->bnc"}> : () -> ()
    %cst = arith.constant dense<0.000000e+00> : vector<2x8x128xf32>
    %3 = tpu.matmul %1, %2, %cst {dimension_numbers = #tpu.dot_dimension_numbers<[2], [0], [0, 1], [1], [0, 0, 0, 1, 1, 1], [], []>} : vector<2x8x8xbf16>, vector<8x128xbf16>, vector<2x8x128xf32> -> vector<2x8x128xf32>
    "tpu.trace_stop"() : () -> ()
    %c0_4 = arith.constant 0 : index
    %c0_5 = arith.constant 0 : index
    %4 = vector.load %arg4[%c0_4, %c0_5] : memref<8x128xf32, #tpu.memory_space<vmem>>, vector<8x128xf32>
    %5 = vector.shape_cast %4 : vector<8x128xf32> to vector<1x8x128xf32>
    %6 = vector.broadcast %5 : vector<1x8x128xf32> to vector<2x8x128xf32>
    %7 = arith.addf %3, %6 : vector<2x8x128xf32>
    %c0_6 = arith.constant 0 : index
    %c0_7 = arith.constant 0 : index
    %8 = vector.load %arg3[%c0_6, %c0_7] : memref<1x128xf32, #tpu.memory_space<vmem>>, vector<1x128xf32>
    %9 = vector.shape_cast %8 : vector<1x128xf32> to vector<1x1x128xf32>
    %10 = vector.broadcast %9 : vector<1x1x128xf32> to vector<2x8x128xf32>
    %11 = arith.addf %7, %10 : vector<2x8x128xf32>
    %12 = arith.truncf %11 : vector<2x8x128xf32> to vector<2x8x128xbf16>
    %c0_8 = arith.constant 0 : index
    %c0_9 = arith.constant 0 : index
    %c0_10 = arith.constant 0 : index
    %13 = vector.load %arg5[%c0_8, %c0_9, %c0_10] : memref<2x8x128xbf16, #tpu.memory_space<vmem>>, vector<2x8x128xbf16>
    tpu.vector_store %arg5[%c0_8, %c0_9, %c0_10], %12 {strides = array<i32>} : memref<2x8x128xbf16, #tpu.memory_space<vmem>>, vector<2x8x128xbf16>,
    return
  }
  func.func @transform_0(%arg0: i32) -> (i32, i32, i32) {
    %c0_i32 = arith.constant 0 : i32
    %c0_i32_0 = arith.constant 0 : i32
    %c0_i32_1 = arith.constant 0 : i32
    return %arg0, %c0_i32, %c0_i32_0 : i32, i32, i32
  }
  func.func @transform_1(%arg0: i32) -> (i32, i32) {
    %c0_i32 = arith.constant 0 : i32
    %c0_i32_0 = arith.constant 0 : i32
    %c0_i32_1 = arith.constant 0 : i32
    return %c0_i32, %c0_i32_0 : i32, i32
  }
  func.func @transform_2(%arg0: i32) -> (i32, i32) {
    %c0_i32 = arith.constant 0 : i32
    %c0_i32_0 = arith.constant 0 : i32
    %c0_i32_1 = arith.constant 0 : i32
    return %c0_i32, %c0_i32_0 : i32, i32
  }
  func.func @transform_3(%arg0: i32) -> (i32, i32) {
    %c0_i32 = arith.constant 0 : i32
    %c0_i32_0 = arith.constant 0 : i32
    %c0_i32_1 = arith.constant 0 : i32
    return %c0_i32, %c0_i32_0 : i32, i32
  }
  func.func @transform_4(%arg0: i32) -> (i32, i32, i32) {
    %c0_i32 = arith.constant 0 : i32
    %c0_i32_0 = arith.constant 0 : i32
    %c0_i32_1 = arith.constant 0 : i32
    return %arg0, %c0_i32, %c0_i32_0 : i32, i32, i32
  }
}

</mosaic_0001>

<llo_original>
// kernel: tpu_custom_call.1
$region0: #{tpu_custom_call.1}
  #allocation0 [shape = 'u32[]', space=smem, size = 0x4, offset = 0x4, fixed_abs, tag = 'smem constant byte address 0x4 - core index']
  #allocation1 [shape = 'u32[144,128]{1,0:T(1,128)}', space=vmem, size = 0x12000, scoped, tag = 'internal scratch']
  %s0 = inlined_call_operand.hbm [shape: f32[2,8,8], index: 0, kind: input, shape index: {}]
  %s1 = inlined_call_operand.hbm [shape: bf16[8,128], index: 1, kind: input, shape index: {}]
  %s2 = inlined_call_operand.vmem [shape: f32[1,128], index: 2, kind: input, shape index: {}]
  %s3 = inlined_call_operand.hbm [shape: f32[8,128], index: 3, kind: input, shape index: {}]
  %s4 = inlined_call_operand.hbm [shape: bf16[2,8,128], index: 4, kind: output, shape index: {}]
  %s5 = sld [smem:[#allocation0]]
  $region38: #{tpu_custom_call.1} parent=0
    _
  %s7 = ssub.s32 1, %s5
  %s8 = scalar_select 0, %s7, %s5
  $region1: #{tpu_custom_call.1} parent=0
    #allocation2 [shape = 'u8[8192]{0}', space=vmem, size = 0x2000, scoped, tag = 'input window, operand 0, single buffered']
    #allocation3 [shape = 's32[1]{0}', space=sflag, size = 0x4, scoped, tag = 'scoped memory for tpu_custom_call.1']
    #allocation4 [shape = 's32[1]{0}', space=sflag, size = 0x4, scoped, tag = 'scoped memory for tpu_custom_call.1']
    #allocation5 [shape = 'u8[2048]{0}', space=vmem, size = 0x800, scoped, tag = 'input window, operand 1, single buffered']
    #allocation6 [shape = 's32[1]{0}', space=sflag, size = 0x4, scoped, tag = 'scoped memory for tpu_custom_call.1']
    #allocation7 [shape = 'u8[4096]{0}', space=vmem, size = 0x1000, scoped, tag = 'input window, operand 3, single buffered']
    #allocation8 [shape = 'u8[4096]{0}', space=vmem, size = 0x1000, scoped, tag = 'output window, operand 0, single buffered']
    %9 = vsyncpa [#allocation3], 0
    %10 = vsyncpa [#allocation6], 0
    %11 = vsyncpa [#allocation4], 0
    // Predicated region
    $region2: #{tpu_custom_call.1} parent=1 // pred_check
      _
    $region3: #{tpu_custom_call.1} parent=1 // pred_check_branch
      %13 = sbr.rel (0) target = $region5
    $region4: #{tpu_custom_call.1} parent=1 // pred_region
      %s15 = ssub.s32 256, 256
      %16 = vsyncadd [#allocation3], %s15
      %s17 = sshll.u32 [#allocation2], 4
      %s18 = int_to_ptr.vmem [resolvable:$true] %s17
      %23 = dma.hbm_to_vmem [thread:$0]  %s0, 256, %s18, [#allocation3], 128, 128, 8
    $region5: #{tpu_custom_call.1} parent=1 // pred_fallthru
      _
    // Predicated region
    $region6: #{tpu_custom_call.1} parent=1 // pred_check
      _
    $region7: #{tpu_custom_call.1} parent=1 // pred_check_branch
      %25 = sbr.rel (0) target = $region9
    $region8: #{tpu_custom_call.1} parent=1 // pred_region
      %s27 = ssub.s32 64, 64
      %28 = vsyncadd [#allocation6], %s27
      %s30 = sshll.u32 [#allocation5], 4
      %s31 = int_to_ptr.vmem [resolvable:$true] %s30
      %33 = dma.hbm_to_vmem [thread:$0]  %s1, 64, %s31, [#allocation6]
    $region9: #{tpu_custom_call.1} parent=1 // pred_fallthru
      _
    // Predicated region
    $region10: #{tpu_custom_call.1} parent=1 // pred_check
      _
    $region11: #{tpu_custom_call.1} parent=1 // pred_check_branch
      %35 = sbr.rel (0) target = $region13
    $region12: #{tpu_custom_call.1} parent=1 // pred_region
      _
    $region13: #{tpu_custom_call.1} parent=1 // pred_fallthru
      _
    // Predicated region
    $region14: #{tpu_custom_call.1} parent=1 // pred_check
      _
    $region15: #{tpu_custom_call.1} parent=1 // pred_check_branch
      %37 = sbr.rel (0) target = $region17
    $region16: #{tpu_custom_call.1} parent=1 // pred_region
      %s39 = ssub.s32 128, 128
      %40 = vsyncadd [#allocation6], %s39
      %s42 = sshll.u32 [#allocation7], 4
      %s43 = int_to_ptr.vmem [resolvable:$true] %s42
      %45 = dma.hbm_to_vmem [thread:$0]  %s3, 128, %s43, [#allocation6]
    $region17: #{tpu_custom_call.1} parent=1 // pred_fallthru
      _
    // Predicated region
    $region18: #{tpu_custom_call.1} parent=1 // pred_check
      _
    $region19: #{tpu_custom_call.1} parent=1 // pred_check_branch
      %47 = sbr.rel (0) target = $region21
    $region20: #{tpu_custom_call.1} parent=1 // pred_region
      %48 = dma.done [#allocation3], 256
    $region21: #{tpu_custom_call.1} parent=1 // pred_fallthru
      _
    // Predicated region
    $region22: #{tpu_custom_call.1} parent=1 // pred_check
      _
    $region23: #{tpu_custom_call.1} parent=1 // pred_check_branch
      %50 = sbr.rel (0) target = $region25
    $region24: #{tpu_custom_call.1} parent=1 // pred_region
      %51 = dma.done [#allocation6], 64
    $region25: #{tpu_custom_call.1} parent=1 // pred_fallthru
      _
    // Predicated region
    $region26: #{tpu_custom_call.1} parent=1 // pred_check
      _
    $region27: #{tpu_custom_call.1} parent=1 // pred_check_branch
      %53 = sbr.rel (0) target = $region29
    $region28: #{tpu_custom_call.1} parent=1 // pred_region
      %54 = dma.done [#allocation6], 128
    $region29: #{tpu_custom_call.1} parent=1 // pred_fallthru
      _
    %v56 = vld [vmem:[#allocation2] sm:$0xff]
    %v57 = vld [vmem:[#allocation2 + $0x8] sm:$0xff]
    %v58 = vpack.c.bf16 %v56, %v56
    %v59 = vpack.c.bf16 %v57, %v57
    %v60 = vld [vmem:[#allocation5] sm:$0xf]
    %v61 = vld [vmem:[#allocation7] sm:$0xff]
    %v64 = vunpack.c.l.b16 %v58
    %v65 = vunpack.c.l.b16 %v59
    %v66 = vpack.c.b16 %v65, %v64
    %vm67 = vcmask 64512
    %v69 = vsel %vm67, %v66, 0
    %vm71 = vcmask 1043456
    %v73 = vsel %vm71, %v60, 0
    %75 = vmatprep.subr.bf16.mxu0 0
    %76 = vmatpush1.bf16.msra.mxu0 0
    %77 = vmatprep.subr.bf16.mxu0 0
    %78 = vmatpush1.bf16.msra.mxu0 0
    %79 = vmatprep.subr.bf16.mxu0 0
    %80 = vmatpush1.bf16.msra.mxu0 0
    %81 = vmatprep.subr.bf16.mxu0 0
    %82 = vmatpush1.bf16.msra.mxu0 0
    %83 = vmatprep.subr.bf16.mxu0 0
    %84 = vmatpush1.bf16.msra.mxu0 0
    %85 = vmatprep.subr.bf16.mxu0 0
    %86 = vmatpush1.bf16.msra.mxu0 0
    %87 = vmatprep.subr.bf16.mxu0 0
    %88 = vmatpush1.bf16.msra.mxu0 0
    %89 = vmatprep.subr.bf16.mxu0 0
    %90 = vmatpush1.bf16.msra.mxu0 %v73
    %91 = vmatprep.subr.bf16.mxu0 0
    %92 = vmatpush2.bf16.msra.mxu0 0
    %93 = vmatprep.subr.bf16.mxu0 0
    %94 = vmatpush2.bf16.msra.mxu0 0
    %95 = vmatprep.subr.bf16.mxu0 0
    %96 = vmatpush2.bf16.msra.mxu0 0
    %97 = vmatprep.subr.bf16.mxu0 0
    %98 = vmatpush2.bf16.msra.mxu0 0
    %99 = vmatprep.subr.bf16.mxu0 0
    %100 = vmatpush2.bf16.msra.mxu0 0
    %101 = vmatprep.subr.bf16.mxu0 0
    %102 = vmatpush2.bf16.msra.mxu0 0
    %103 = vmatprep.subr.bf16.mxu0 0
    %104 = vmatpush2.bf16.msra.mxu0 0
    %105 = vmatprep.subr.bf16.mxu0 0
    %106 = vmatpush2.bf16.msra.mxu0 0
    %107 = vmatprep.mubr.bf16.mxu0 0
    %108 = vmatmul.mubr.bf16.gmra.mxu0 %v69
    %v109 = vpop.f32.mrf.mxu0
    %v110 = vadd.f32 %v61, %v109
    %v111 = vpop.f32.mrf.mxu0
    %v112 = vpop.f32.mrf.mxu0
    %v113 = vadd.f32 %v61, %v112
    %v114 = vpop.f32.mrf.mxu0
    %115 = vdwg.mxu0
    %v116 = vld [vmem:[%s2] sm:$0x1]
    %v118 = vlaneseq
    %v119 = vshrl.u32 %v118, 7
    %v120 = vsub.s32 0, %v119
    %v121 = vrot.slane %v116, %v120
    %v123 = vadd.f32 %v110, %v121
    %v124 = vadd.f32 %v113, %v121
    %v125 = vpack.c.bf16 %v123, %v123
    %v126 = vpack.c.bf16 %v124, %v124
    %127 = vst [vmem:[#allocation8] sm:$0xf] %v125
    %128 = vst [vmem:[#allocation8 + $0x4] sm:$0xf] %v126
    // Predicated region
    $region30: #{tpu_custom_call.1} parent=1 // pred_check
      _
    $region31: #{tpu_custom_call.1} parent=1 // pred_check_branch
      %130 = sbr.rel (0) target = $region33
    $region32: #{tpu_custom_call.1} parent=1 // pred_region
      %s132 = ssub.s32 128, 128
      %133 = vsyncadd [#allocation4], %s132
      %s134 = sshll.u32 [#allocation8], 4
      %s135 = int_to_ptr.vmem [resolvable:$true] %s134
      %140 = dma.vmem_to_hbm [thread:$0]  %s135, 128, %s4, [#allocation4], 64, 64, 4
    $region33: #{tpu_custom_call.1} parent=1 // pred_fallthru
      _
    // Predicated region
    $region34: #{tpu_custom_call.1} parent=1 // pred_check
      _
    $region35: #{tpu_custom_call.1} parent=1 // pred_check_branch
      %142 = sbr.rel (0) target = $region37
    $region36: #{tpu_custom_call.1} parent=1 // pred_region
      %143 = dma.done [#allocation4], 128
    $region37: #{tpu_custom_call.1} parent=1 // pred_fallthru
      _
    %144 = vsyncpa [#allocation3], 1
    %145 = vsyncpa [#allocation6], 1
    %146 = vsyncpa [#allocation4], 1

</llo_original>
